<compile_context>
chip_gen: v7x
topology: tpu7x:2x2x1
jax: 0.10.0
libtpu: 0.0.40
codegen_flags: <defaults>
</compile_context>

<pallas_src>
import jax
import jax.numpy as jnp
from jax.experimental import pallas as pl
from jax.experimental.pallas import tpu as pltpu

BN_EPS = 1e-5
LANE = 128          # TPU lane width; input feature dim is zero-padded to this


def _softplus(z):
    # stable softplus; -log(sigmoid(z)) = softplus(-z)
    return jnp.maximum(z, 0.0) + jnp.log1p(jnp.exp(-jnp.abs(z)))


# ---------------------------------------------------------------------------
# Fused forward kernel: embed(real) + embed(corrupted) + readout + BCE loss
# ---------------------------------------------------------------------------
def inspectionl_kernel(adj_ref, x2_ref,
                       w1a_ref, b1a_ref, g1a_ref, be1a_ref, w2a_ref, b2a_ref,
                       w1b_ref, b1b_ref, g1b_ref, be1b_ref, w2b_ref, b2b_ref,
                       wd_ref, loss_ref):
    n = x2_ref.shape[1]
    adj = adj_ref[...]                         # (N, N) bf16 — read once, VMEM-resident

    def gin_layer(h3, w1_ref, b1_ref, g_ref, be_ref, w2_ref, b2_ref):
        # h3: (2, N, F) f32 — real / corrupted streams stacked on the leading axis.
        s2, _, f = h3.shape
        hb = h3.astype(jnp.bfloat16)
        # GIN aggregation (eps = 0): x + A @ x, per stream.  adj is VMEM-resident,
        # so the second 128-lane MXU pass only costs extra VMEM loads; in exchange
        # there is no lane-concat / column-split relayout anywhere in the layer.
        # TODO(synk): for large-N tiles on v6e/v7x, a fused 256-lane RHS (both
        # streams side by side) would halve the adj passes at the cost of a concat.
        agg = h3.reshape(s2 * n, f) + jnp.concatenate(
            [jnp.dot(adj, hb[0], preferred_element_type=jnp.float32),
             jnp.dot(adj, hb[1], preferred_element_type=jnp.float32)], axis=0)
        # Linear 1, shared across both streams (one MXU pass, M = 2N).
        h = jnp.dot(agg.astype(jnp.bfloat16), w1_ref[...].astype(jnp.bfloat16),
                    preferred_element_type=jnp.float32) + b1_ref[...]
        hid = h.shape[-1]
        # BatchNorm1d (training-mode biased batch stats), per stream via a single
        # batched reduce over the node axis.  The (2N,H)<->(2,N,H) reshapes are
        # free row-major reshapes (N % 8 == 0); no per-stream slicing/copies.
        h = h.reshape(s2, n, hid)
        mu = jnp.mean(h, axis=1, keepdims=True)                  # (2, 1, H)
        c = h - mu
        var = jnp.mean(c * c, axis=1, keepdims=True)             # biased, like PyTorch train
        h = c * jax.lax.rsqrt(var + BN_EPS) * g_ref[...] + be_ref[...]
        h = jnp.maximum(h, 0.0)
        # Linear 2 + ReLU, again shared across both streams.
        h = jnp.dot(h.reshape(s2 * n, hid).astype(jnp.bfloat16),
                    w2_ref[...].astype(jnp.bfloat16),
                    preferred_element_type=jnp.float32) + b2_ref[...]
        h = jnp.maximum(h, 0.0)
        return h.reshape(s2, n, h.shape[-1])

    h3 = gin_layer(x2_ref[...], w1a_ref, b1a_ref, g1a_ref, be1a_ref, w2a_ref, b2a_ref)
    h3 = gin_layer(h3, w1b_ref, b1b_ref, g1b_ref, be1b_ref, w2b_ref, b2b_ref)
    hr, hc = h3[0], h3[1]                                        # (N, D) each

    # readout over the real embeddings: s = sigmoid(mean over nodes)
    s = jax.nn.sigmoid(jnp.mean(hr, axis=0, keepdims=True))      # (1, D)
    # discriminate(x, s) = sigmoid((x @ Wd^T) @ s^T) = sigmoid(x . (s @ Wd));
    # Wd is stored in PyTorch nn.Linear (out_features, in_features) layout.
    proj = jnp.dot(s, wd_ref[...], preferred_element_type=jnp.float32)   # (1, D)
    z_r = jnp.sum(hr * proj, axis=-1, keepdims=True)             # (N, 1)
    z_c = jnp.sum(hc * proj, axis=-1, keepdims=True)             # (N, 1)

    # BCE(sigmoid(z), targets=[1..1, 0..0]) with PyTorch BCELoss's -100 log clamp.
    per_r = jnp.minimum(_softplus(-z_r), 100.0)      # targets = 1
    per_c = jnp.minimum(_softplus(z_c), 100.0)       # targets = 0
    loss_ref[0, 0] = (jnp.sum(per_r) + jnp.sum(per_c)) / (2.0 * n)


# ---------------------------------------------------------------------------
# Wrapper
# ---------------------------------------------------------------------------
def inspectionl_loss(params, x2, adj_bf16):
    n, f_pad = x2.shape[1], x2.shape[2]
    l1, l2 = params["layer1"], params["layer2"]
    hid, mid, out = l1[0].shape[1], l1[4].shape[1], l2[4].shape[1]
    args = (adj_bf16, x2, *l1, *l2, params["wd"])

    operand_bytes = sum(int(a.size) * a.dtype.itemsize for a in args)
    act_bytes = 2 * n * max(f_pad, hid, mid, out) * 4
    # Whole-array design: everything lives in VMEM with no pipeline buffering.
    # 64 MiB cap == physical VMEM per TensorCore on v7x; beyond that the
    # node-block tiling fallback (see TODO at top) must kick in.
    vmem_limit = int(min(max(operand_bytes + 10 * act_bytes, 32 << 20), 64 << 20))

    flops = (4 * n * n * f_pad + 4 * n * f_pad * hid + 4 * n * hid * mid   # layer 1
             + 4 * n * n * mid + 4 * n * mid * hid + 4 * n * hid * out     # layer 2
             + 2 * out * out + 8 * n * out)                                # readout / disc
    cost = pl.CostEstimate(flops=int(flops),
                           transcendentals=int(4 * n + out),
                           bytes_accessed=int(operand_bytes + 4))

    loss = pl.pallas_call(
        inspectionl_kernel,
        out_shape=jax.ShapeDtypeStruct((1, 1), jnp.float32),
        in_specs=[pl.BlockSpec(memory_space=pltpu.MemorySpace.VMEM) for _ in args],
        out_specs=pl.BlockSpec(memory_space=pltpu.MemorySpace.SMEM),
        compiler_params=pltpu.CompilerParams(vmem_limit_bytes=vmem_limit),
        cost_estimate=cost,
    )(*args)
    return loss[0, 0]


def build_adjacency(edge_index, n):
    # Densify edge_index (row 0 = source, row 1 = target): A[t, s] += 1.
    # bf16 is exact for small integer multiplicities.  Built once / cacheable
    # for a static graph (hoisted out of the per-step forward).
    adj = jnp.zeros((n, n), jnp.float32).at[edge_index[1], edge_index[0]].add(1.0)
    return adj.astype(jnp.bfloat16)


def pad_features(x, f_pad=LANE):
    # Zero-pad the feature dim so all layer-1 contractions are lane-tile aligned.
    pad = f_pad - x.shape[1]
    return x if pad <= 0 else jnp.pad(x, ((0, 0), (0, pad)))


# ---------------------------------------------------------------------------
# Deterministic parameter init (PyTorch nn.Linear-style uniform)
# ---------------------------------------------------------------------------
def _linear_init(key, fan_in, fan_out, pad_in=None):
    kw, kb = jax.random.split(key)
    bound = 1.0 / (fan_in ** 0.5)
    w = jax.random.uniform(kw, (fan_in, fan_out), jnp.float32, -bound, bound)
    if pad_in is not None and pad_in > fan_in:
        # zero fan-in rows pair with the zero-padded input columns -> exact
        w = jnp.pad(w, ((0, pad_in - fan_in), (0, 0)))
    b = jax.random.uniform(kb, (1, fan_out), jnp.float32, -bound, bound)
    return w, b


def _gin_mlp_init(key, in_dim, hid_dim, out_dim, pad_in=None):
    k1, k2 = jax.random.split(key)
    w1, b1 = _linear_init(k1, in_dim, hid_dim, pad_in=pad_in)
    gamma = jnp.ones((1, hid_dim), jnp.float32)
    beta = jnp.zeros((1, hid_dim), jnp.float32)
    w2, b2 = _linear_init(k2, hid_dim, out_dim)
    return (w1, b1, gamma, beta, w2, b2)


def init_params(key, input_dim, hidden, output_dim, f_pad=LANE):
    k1, k2, k3 = jax.random.split(key, 3)
    bound = 1.0 / (output_dim ** 0.5)
    # TODO(synk): BatchNorm running_mean/var are never updated (train-loss only);
    # eval-mode parity with the PyTorch module is not reproduced.
    return {
        # GINAggrNet's output_dimension defaults to 128 in the PyTorch code, so
        # layer1's MLP output equals `hidden` here for a consistent chain.
        "layer1": _gin_mlp_init(k1, input_dim, hidden, hidden, pad_in=f_pad),
        "layer2": _gin_mlp_init(k2, hidden, hidden, output_dim),
        "wd": jax.random.uniform(k3, (output_dim, output_dim), jnp.float32, -bound, bound),
    }


# ---------------------------------------------------------------------------
if __name__ == "__main__":
    key = jax.random.PRNGKey(0)
    N, F_IN, HID, OUT = 16, 16, 128, 128       # HID/OUT = PyTorch defaults, lane-dense
    assert N % 8 == 0, "free (2N,F)<->(2,N,F) reshapes require N % 8 == 0"
    keys = jax.random.split(key, 6)

    x = jax.random.normal(keys[0], (N, F_IN), jnp.float32)

    # deterministic edge_index: a ring plus some random edges
    src_ring = jnp.arange(N, dtype=jnp.int32)
    dst_ring = (src_ring + 1) % N
    extra_src = jax.random.randint(keys[1], (32,), 0, N, dtype=jnp.int32)
    extra_dst = jax.random.randint(keys[2], (32,), 0, N, dtype=jnp.int32)
    edge_index = jnp.stack([jnp.concatenate([src_ring, extra_src]),
                            jnp.concatenate([dst_ring, extra_dst])])

    params = init_params(keys[3], F_IN, HID, OUT, f_pad=LANE)

    adj_bf16 = build_adjacency(edge_index, N)      # hoisted / cacheable
    perm = jax.random.permutation(keys[4], N)      # corrupt(): node permutation
    x_pad = pad_features(x, LANE)                  # (N, 128) zero-padded features
    x2 = jnp.stack([x_pad, x_pad[perm]], axis=0)   # (2, N, 128): real / corrupted

    loss = jax.jit(inspectionl_loss)(params, x2, adj_bf16)
    jax.block_until_ready(loss)
    print("KERNEL_OK")
</pallas_src>

<mosaic_0001>
module attributes {stable_mosaic.version = 11 : i64} {
  func.func @inspectionl_kernel(%arg0: memref<16x16xbf16, #tpu.memory_space<vmem>>, %arg1: memref<2x16x128xf32, #tpu.memory_space<vmem>>, %arg2: memref<128x128xf32, #tpu.memory_space<vmem>>, %arg3: memref<1x128xf32, #tpu.memory_space<vmem>>, %arg4: memref<1x128xf32, #tpu.memory_space<vmem>>, %arg5: memref<1x128xf32, #tpu.memory_space<vmem>>, %arg6: memref<128x128xf32, #tpu.memory_space<vmem>>, %arg7: memref<1x128xf32, #tpu.memory_space<vmem>>, %arg8: memref<128x128xf32, #tpu.memory_space<vmem>>, %arg9: memref<1x128xf32, #tpu.memory_space<vmem>>, %arg10: memref<1x128xf32, #tpu.memory_space<vmem>>, %arg11: memref<1x128xf32, #tpu.memory_space<vmem>>, %arg12: memref<128x128xf32, #tpu.memory_space<vmem>>, %arg13: memref<1x128xf32, #tpu.memory_space<vmem>>, %arg14: memref<128x128xf32, #tpu.memory_space<vmem>>, %arg15: memref<1x1xf32, #tpu.memory_space<smem>>) attributes {dimension_semantics = [], scalar_prefetch = 0 : i64, scratch_operands = 0 : i64, tpu.core_type = #tpu.core_type<tc>} {
    %c0 = arith.constant 0 : index
    %c0_0 = arith.constant 0 : index
    %0 = vector.load %arg0[%c0, %c0_0] : memref<16x16xbf16, #tpu.memory_space<vmem>>, vector<16x16xbf16>
    %c0_1 = arith.constant 0 : index
    %c0_2 = arith.constant 0 : index
    %c0_3 = arith.constant 0 : index
    %1 = vector.load %arg1[%c0_1, %c0_2, %c0_3] : memref<2x16x128xf32, #tpu.memory_space<vmem>>, vector<2x16x128xf32>
    %2 = arith.truncf %1 : vector<2x16x128xf32> to vector<2x16x128xbf16>
    %3 = vector.shape_cast %1 : vector<2x16x128xf32> to vector<32x128xf32>
    %4 = vector.extract_strided_slice %2 {offsets = [0, 0, 0], sizes = [1, 16, 128], strides = [1, 1, 1]} : vector<2x16x128xbf16> to vector<1x16x128xbf16>
    %5 = vector.shape_cast %4 : vector<1x16x128xbf16> to vector<16x128xbf16>
    %cst = arith.constant dense<0.000000e+00> : vector<16x128xf32>
    %6 = tpu.matmul %0, %5, %cst {dimension_numbers = #tpu.dot_dimension_numbers<[1], [0], [0], [1], [0, 0, 1, 1], [], []>} : vector<16x16xbf16>, vector<16x128xbf16>, vector<16x128xf32> -> vector<16x128xf32>
    %7 = vector.extract_strided_slice %2 {offsets = [1, 0, 0], sizes = [1, 16, 128], strides = [1, 1, 1]} : vector<2x16x128xbf16> to vector<1x16x128xbf16>
    %8 = vector.shape_cast %7 : vector<1x16x128xbf16> to vector<16x128xbf16>
    %cst_4 = arith.constant dense<0.000000e+00> : vector<16x128xf32>
    %9 = tpu.matmul %0, %8, %cst_4 {dimension_numbers = #tpu.dot_dimension_numbers<[1], [0], [0], [1], [0, 0, 1, 1], [], []>} : vector<16x16xbf16>, vector<16x128xbf16>, vector<16x128xf32> -> vector<16x128xf32>
    %10 = tpu.concatenate %6, %9 in 0 : vector<16x128xf32>, vector<16x128xf32> -> vector<32x128xf32>
    %11 = arith.addf %3, %10 : vector<32x128xf32>
    %12 = arith.truncf %11 : vector<32x128xf32> to vector<32x128xbf16>
    %c0_5 = arith.constant 0 : index
    %c0_6 = arith.constant 0 : index
    %13 = vector.load %arg2[%c0_5, %c0_6] : memref<128x128xf32, #tpu.memory_space<vmem>>, vector<128x128xf32>
    %14 = arith.truncf %13 : vector<128x128xf32> to vector<128x128xbf16>
    %cst_7 = arith.constant dense<0.000000e+00> : vector<32x128xf32>
    %15 = tpu.matmul %12, %14, %cst_7 {dimension_numbers = #tpu.dot_dimension_numbers<[1], [0], [0], [1], [0, 0, 1, 1], [], []>} : vector<32x128xbf16>, vector<128x128xbf16>, vector<32x128xf32> -> vector<32x128xf32>
    %c0_8 = arith.constant 0 : index
    %c0_9 = arith.constant 0 : index
    %16 = vector.load %arg3[%c0_8, %c0_9] : memref<1x128xf32, #tpu.memory_space<vmem>>, vector<1x128xf32>
    %17 = vector.broadcast %16 : vector<1x128xf32> to vector<32x128xf32>
    %18 = arith.addf %15, %17 : vector<32x128xf32>
    %19 = vector.shape_cast %18 : vector<32x128xf32> to vector<2x16x128xf32>
    %cst_10 = arith.constant dense<0.000000e+00> : vector<2x128xf32>
    %20 = vector.multi_reduction <add>, %19, %cst_10 [1] : vector<2x16x128xf32> to vector<2x128xf32>
    %21 = vector.shape_cast %20 : vector<2x128xf32> to vector<2x1x128xf32>
    %cst_11 = arith.constant 1.600000e+01 : f32
    %22 = vector.broadcast %cst_11 : f32 to vector<2x1x128xf32>
    %23 = arith.divf %21, %22 : vector<2x1x128xf32>
    %24 = vector.broadcast %23 : vector<2x1x128xf32> to vector<2x16x128xf32>
    %25 = arith.subf %19, %24 : vector<2x16x128xf32>
    %26 = arith.mulf %25, %25 : vector<2x16x128xf32>
    %cst_12 = arith.constant dense<0.000000e+00> : vector<2x128xf32>
    %27 = vector.multi_reduction <add>, %26, %cst_12 [1] : vector<2x16x128xf32> to vector<2x128xf32>
    %28 = vector.shape_cast %27 : vector<2x128xf32> to vector<2x1x128xf32>
    %cst_13 = arith.constant 1.600000e+01 : f32
    %29 = vector.broadcast %cst_13 : f32 to vector<2x1x128xf32>
    %30 = arith.divf %28, %29 : vector<2x1x128xf32>
    %cst_14 = arith.constant 9.99999974E-6 : f32
    %31 = vector.broadcast %cst_14 : f32 to vector<2x1x128xf32>
    %32 = arith.addf %30, %31 : vector<2x1x128xf32>
    %33 = math.rsqrt %32 : vector<2x1x128xf32>
    %34 = vector.broadcast %33 : vector<2x1x128xf32> to vector<2x16x128xf32>
    %35 = arith.mulf %25, %34 : vector<2x16x128xf32>
    %c0_15 = arith.constant 0 : index
    %c0_16 = arith.constant 0 : index
    %36 = vector.load %arg4[%c0_15, %c0_16] : memref<1x128xf32, #tpu.memory_space<vmem>>, vector<1x128xf32>
    %37 = vector.shape_cast %36 : vector<1x128xf32> to vector<1x1x128xf32>
    %38 = vector.broadcast %37 : vector<1x1x128xf32> to vector<2x16x128xf32>
    %39 = arith.mulf %35, %38 : vector<2x16x128xf32>
    %c0_17 = arith.constant 0 : index
    %c0_18 = arith.constant 0 : index
    %40 = vector.load %arg5[%c0_17, %c0_18] : memref<1x128xf32, #tpu.memory_space<vmem>>, vector<1x128xf32>
    %41 = vector.shape_cast %40 : vector<1x128xf32> to vector<1x1x128xf32>
    %42 = vector.broadcast %41 : vector<1x1x128xf32> to vector<2x16x128xf32>
    %43 = arith.addf %39, %42 : vector<2x16x128xf32>
    %cst_19 = arith.constant 0.000000e+00 : f32
    %44 = vector.broadcast %cst_19 : f32 to vector<2x16x128xf32>
    %45 = arith.maximumf %43, %44 : vector<2x16x128xf32>
    %46 = vector.shape_cast %45 : vector<2x16x128xf32> to vector<32x128xf32>
    %47 = arith.truncf %46 : vector<32x128xf32> to vector<32x128xbf16>
    %c0_20 = arith.constant 0 : index
    %c0_21 = arith.constant 0 : index
    %48 = vector.load %arg6[%c0_20, %c0_21] : memref<128x128xf32, #tpu.memory_space<vmem>>, vector<128x128xf32>
    %49 = arith.truncf %48 : vector<128x128xf32> to vector<128x128xbf16>
    %cst_22 = arith.constant dense<0.000000e+00> : vector<32x128xf32>
    %50 = tpu.matmul %47, %49, %cst_22 {dimension_numbers = #tpu.dot_dimension_numbers<[1], [0], [0], [1], [0, 0, 1, 1], [], []>} : vector<32x128xbf16>, vector<128x128xbf16>, vector<32x128xf32> -> vector<32x128xf32>
    %c0_23 = arith.constant 0 : index
    %c0_24 = arith.constant 0 : index
    %51 = vector.load %arg7[%c0_23, %c0_24] : memref<1x128xf32, #tpu.memory_space<vmem>>, vector<1x128xf32>
    %52 = vector.broadcast %51 : vector<1x128xf32> to vector<32x128xf32>
    %53 = arith.addf %50, %52 : vector<32x128xf32>
    %cst_25 = arith.constant 0.000000e+00 : f32
    %54 = vector.broadcast %cst_25 : f32 to vector<32x128xf32>
    %55 = arith.maximumf %53, %54 : vector<32x128xf32>
    %56 = vector.shape_cast %55 : vector<32x128xf32> to vector<2x16x128xf32>
    %57 = arith.truncf %56 : vector<2x16x128xf32> to vector<2x16x128xbf16>
    %58 = vector.shape_cast %56 : vector<2x16x128xf32> to vector<32x128xf32>
    %59 = vector.extract_strided_slice %57 {offsets = [0, 0, 0], sizes = [1, 16, 128], strides = [1, 1, 1]} : vector<2x16x128xbf16> to vector<1x16x128xbf16>
    %60 = vector.shape_cast %59 : vector<1x16x128xbf16> to vector<16x128xbf16>
    %cst_26 = arith.constant dense<0.000000e+00> : vector<16x128xf32>
    %61 = tpu.matmul %0, %60, %cst_26 {dimension_numbers = #tpu.dot_dimension_numbers<[1], [0], [0], [1], [0, 0, 1, 1], [], []>} : vector<16x16xbf16>, vector<16x128xbf16>, vector<16x128xf32> -> vector<16x128xf32>
    %62 = vector.extract_strided_slice %57 {offsets = [1, 0, 0], sizes = [1, 16, 128], strides = [1, 1, 1]} : vector<2x16x128xbf16> to vector<1x16x128xbf16>
    %63 = vector.shape_cast %62 : vector<1x16x128xbf16> to vector<16x128xbf16>
    %cst_27 = arith.constant dense<0.000000e+00> : vector<16x128xf32>
    %64 = tpu.matmul %0, %63, %cst_27 {dimension_numbers = #tpu.dot_dimension_numbers<[1], [0], [0], [1], [0, 0, 1, 1], [], []>} : vector<16x16xbf16>, vector<16x128xbf16>, vector<16x128xf32> -> vector<16x128xf32>
    %65 = tpu.concatenate %61, %64 in 0 : vector<16x128xf32>, vector<16x128xf32> -> vector<32x128xf32>
    %66 = arith.addf %58, %65 : vector<32x128xf32>
    %67 = arith.truncf %66 : vector<32x128xf32> to vector<32x128xbf16>
    %c0_28 = arith.constant 0 : index
    %c0_29 = arith.constant 0 : index
    %68 = vector.load %arg8[%c0_28, %c0_29] : memref<128x128xf32, #tpu.memory_space<vmem>>, vector<128x128xf32>
    %69 = arith.truncf %68 : vector<128x128xf32> to vector<128x128xbf16>
    %cst_30 = arith.constant dense<0.000000e+00> : vector<32x128xf32>
    %70 = tpu.matmul %67, %69, %cst_30 {dimension_numbers = #tpu.dot_dimension_numbers<[1], [0], [0], [1], [0, 0, 1, 1], [], []>} : vector<32x128xbf16>, vector<128x128xbf16>, vector<32x128xf32> -> vector<32x128xf32>
    %c0_31 = arith.constant 0 : index
    %c0_32 = arith.constant 0 : index
    %71 = vector.load %arg9[%c0_31, %c0_32] : memref<1x128xf32, #tpu.memory_space<vmem>>, vector<1x128xf32>
    %72 = vector.broadcast %71 : vector<1x128xf32> to vector<32x128xf32>
    %73 = arith.addf %70, %72 : vector<32x128xf32>
    %74 = vector.shape_cast %73 : vector<32x128xf32> to vector<2x16x128xf32>
    %cst_33 = arith.constant dense<0.000000e+00> : vector<2x128xf32>
    %75 = vector.multi_reduction <add>, %74, %cst_33 [1] : vector<2x16x128xf32> to vector<2x128xf32>
    %76 = vector.shape_cast %75 : vector<2x128xf32> to vector<2x1x128xf32>
    %cst_34 = arith.constant 1.600000e+01 : f32
    %77 = vector.broadcast %cst_34 : f32 to vector<2x1x128xf32>
    %78 = arith.divf %76, %77 : vector<2x1x128xf32>
    %79 = vector.broadcast %78 : vector<2x1x128xf32> to vector<2x16x128xf32>
    %80 = arith.subf %74, %79 : vector<2x16x128xf32>
    %81 = arith.mulf %80, %80 : vector<2x16x128xf32>
    %cst_35 = arith.constant dense<0.000000e+00> : vector<2x128xf32>
    %82 = vector.multi_reduction <add>, %81, %cst_35 [1] : vector<2x16x128xf32> to vector<2x128xf32>
    %83 = vector.shape_cast %82 : vector<2x128xf32> to vector<2x1x128xf32>
    %cst_36 = arith.constant 1.600000e+01 : f32
    %84 = vector.broadcast %cst_36 : f32 to vector<2x1x128xf32>
    %85 = arith.divf %83, %84 : vector<2x1x128xf32>
    %cst_37 = arith.constant 9.99999974E-6 : f32
    %86 = vector.broadcast %cst_37 : f32 to vector<2x1x128xf32>
    %87 = arith.addf %85, %86 : vector<2x1x128xf32>
    %88 = math.rsqrt %87 : vector<2x1x128xf32>
    %89 = vector.broadcast %88 : vector<2x1x128xf32> to vector<2x16x128xf32>
    %90 = arith.mulf %80, %89 : vector<2x16x128xf32>
    %c0_38 = arith.constant 0 : index
    %c0_39 = arith.constant 0 : index
    %91 = vector.load %arg10[%c0_38, %c0_39] : memref<1x128xf32, #tpu.memory_space<vmem>>, vector<1x128xf32>
    %92 = vector.shape_cast %91 : vector<1x128xf32> to vector<1x1x128xf32>
    %93 = vector.broadcast %92 : vector<1x1x128xf32> to vector<2x16x128xf32>
    %94 = arith.mulf %90, %93 : vector<2x16x128xf32>
    %c0_40 = arith.constant 0 : index
    %c0_41 = arith.constant 0 : index
    %95 = vector.load %arg11[%c0_40, %c0_41] : memref<1x128xf32, #tpu.memory_space<vmem>>, vector<1x128xf32>
    %96 = vector.shape_cast %95 : vector<1x128xf32> to vector<1x1x128xf32>
    %97 = vector.broadcast %96 : vector<1x1x128xf32> to vector<2x16x128xf32>
    %98 = arith.addf %94, %97 : vector<2x16x128xf32>
    %cst_42 = arith.constant 0.000000e+00 : f32
    %99 = vector.broadcast %cst_42 : f32 to vector<2x16x128xf32>
    %100 = arith.maximumf %98, %99 : vector<2x16x128xf32>
    %101 = vector.shape_cast %100 : vector<2x16x128xf32> to vector<32x128xf32>
    %102 = arith.truncf %101 : vector<32x128xf32> to vector<32x128xbf16>
    %c0_43 = arith.constant 0 : index
    %c0_44 = arith.constant 0 : index
    %103 = vector.load %arg12[%c0_43, %c0_44] : memref<128x128xf32, #tpu.memory_space<vmem>>, vector<128x128xf32>
    %104 = arith.truncf %103 : vector<128x128xf32> to vector<128x128xbf16>
    %cst_45 = arith.constant dense<0.000000e+00> : vector<32x128xf32>
    %105 = tpu.matmul %102, %104, %cst_45 {dimension_numbers = #tpu.dot_dimension_numbers<[1], [0], [0], [1], [0, 0, 1, 1], [], []>} : vector<32x128xbf16>, vector<128x128xbf16>, vector<32x128xf32> -> vector<32x128xf32>
    %c0_46 = arith.constant 0 : index
    %c0_47 = arith.constant 0 : index
    %106 = vector.load %arg13[%c0_46, %c0_47] : memref<1x128xf32, #tpu.memory_space<vmem>>, vector<1x128xf32>
    %107 = vector.broadcast %106 : vector<1x128xf32> to vector<32x128xf32>
    %108 = arith.addf %105, %107 : vector<32x128xf32>
    %cst_48 = arith.constant 0.000000e+00 : f32
    %109 = vector.broadcast %cst_48 : f32 to vector<32x128xf32>
    %110 = arith.maximumf %108, %109 : vector<32x128xf32>
    %111 = vector.shape_cast %110 : vector<32x128xf32> to vector<2x16x128xf32>
    %112 = vector.extract_strided_slice %111 {offsets = [0, 0, 0], sizes = [1, 16, 128], strides = [1, 1, 1]} : vector<2x16x128xf32> to vector<1x16x128xf32>
    %113 = vector.shape_cast %112 : vector<1x16x128xf32> to vector<16x128xf32>
    %114 = vector.extract_strided_slice %111 {offsets = [1, 0, 0], sizes = [1, 16, 128], strides = [1, 1, 1]} : vector<2x16x128xf32> to vector<1x16x128xf32>
    %115 = vector.shape_cast %114 : vector<1x16x128xf32> to vector<16x128xf32>
    %cst_49 = arith.constant dense<0.000000e+00> : vector<128xf32>
    %116 = vector.multi_reduction <add>, %113, %cst_49 [0] : vector<16x128xf32> to vector<128xf32>
    %117 = vector.shape_cast %116 : vector<128xf32> to vector<1x128xf32>
    %cst_50 = arith.constant 1.600000e+01 : f32
    %118 = vector.broadcast %cst_50 : f32 to vector<1x128xf32>
    %119 = arith.divf %117, %118 : vector<1x128xf32>
    %120 = arith.negf %119 : vector<1x128xf32>
    %121 = math.exp %120 : vector<1x128xf32>
    %cst_51 = arith.constant 1.000000e+00 : f32
    %122 = vector.broadcast %cst_51 : f32 to vector<1x128xf32>
    %123 = arith.addf %122, %121 : vector<1x128xf32>
    %124 = arith.divf %122, %123 : vector<1x128xf32>
    %c0_52 = arith.constant 0 : index
    %c0_53 = arith.constant 0 : index
    %125 = vector.load %arg14[%c0_52, %c0_53] : memref<128x128xf32, #tpu.memory_space<vmem>>, vector<128x128xf32>
    %cst_54 = arith.constant dense<0.000000e+00> : vector<1x128xf32>
    %126 = tpu.matmul %124, %125, %cst_54 {dimension_numbers = #tpu.dot_dimension_numbers<[1], [0], [0], [1], [0, 0, 1, 1], [], []>} : vector<1x128xf32>, vector<128x128xf32>, vector<1x128xf32> -> vector<1x128xf32>
    %127 = vector.broadcast %126 : vector<1x128xf32> to vector<16x128xf32>
    %128 = arith.mulf %113, %127 : vector<16x128xf32>
    %cst_55 = arith.constant dense<0.000000e+00> : vector<16xf32>
    %129 = vector.multi_reduction <add>, %128, %cst_55 [1] : vector<16x128xf32> to vector<16xf32>
    %130 = vector.shape_cast %129 : vector<16xf32> to vector<16x1xf32>
    %131 = vector.broadcast %126 : vector<1x128xf32> to vector<16x128xf32>
    %132 = arith.mulf %115, %131 : vector<16x128xf32>
    %cst_56 = arith.constant dense<0.000000e+00> : vector<16xf32>
    %133 = vector.multi_reduction <add>, %132, %cst_56 [1] : vector<16x128xf32> to vector<16xf32>
    %134 = vector.shape_cast %133 : vector<16xf32> to vector<16x1xf32>
    %cst_57 = arith.constant 0.000000e+00 : f32
    %135 = vector.broadcast %cst_57 : f32 to vector<16x1xf32>
    %136 = arith.subf %135, %130 : vector<16x1xf32>
    %cst_58 = arith.constant 0.000000e+00 : f32
    %137 = vector.broadcast %cst_58 : f32 to vector<16x1xf32>
    %138 = arith.maximumf %136, %137 : vector<16x1xf32>
    %139 = math.absf %136 : vector<16x1xf32>
    %cst_59 = arith.constant 0.000000e+00 : f32
    %140 = vector.broadcast %cst_59 : f32 to vector<16x1xf32>
    %141 = arith.subf %140, %139 : vector<16x1xf32>
    %142 = math.exp %141 : vector<16x1xf32>
    %143 = math.log1p %142 : vector<16x1xf32>
    %144 = arith.addf %138, %143 : vector<16x1xf32>
    %cst_60 = arith.constant 1.000000e+02 : f32
    %145 = vector.broadcast %cst_60 : f32 to vector<16x1xf32>
    %146 = arith.minimumf %144, %145 : vector<16x1xf32>
    %cst_61 = arith.constant 0.000000e+00 : f32
    %147 = vector.broadcast %cst_61 : f32 to vector<16x1xf32>
    %148 = arith.maximumf %134, %147 : vector<16x1xf32>
    %149 = math.absf %134 : vector<16x1xf32>
    %cst_62 = arith.constant 0.000000e+00 : f32
    %150 = vector.broadcast %cst_62 : f32 to vector<16x1xf32>
    %151 = arith.subf %150, %149 : vector<16x1xf32>
    %152 = math.exp %151 : vector<16x1xf32>
    %153 = math.log1p %152 : vector<16x1xf32>
    %154 = arith.addf %148, %153 : vector<16x1xf32>
    %cst_63 = arith.constant 1.000000e+02 : f32
    %155 = vector.broadcast %cst_63 : f32 to vector<16x1xf32>
    %156 = arith.minimumf %154, %155 : vector<16x1xf32>
    %157 = vector.shape_cast %146 : vector<16x1xf32> to vector<1x16x1xf32>
    %cst_64 = arith.constant dense<0.000000e+00> : vector<1xf32>
    %158 = vector.multi_reduction <add>, %157, %cst_64 [1, 2] : vector<1x16x1xf32> to vector<1xf32>
    %159 = vector.shape_cast %158 : vector<1xf32> to vector<1x1x1xf32>
    %160 = vector.extract %159[0, 0, 0] : f32 from vector<1x1x1xf32>
    %161 = vector.shape_cast %156 : vector<16x1xf32> to vector<1x16x1xf32>
    %cst_65 = arith.constant dense<0.000000e+00> : vector<1xf32>
    %162 = vector.multi_reduction <add>, %161, %cst_65 [1, 2] : vector<1x16x1xf32> to vector<1xf32>
    %163 = vector.shape_cast %162 : vector<1xf32> to vector<1x1x1xf32>
    %164 = vector.extract %163[0, 0, 0] : f32 from vector<1x1x1xf32>
    %165 = arith.addf %160, %164 : f32
    %cst_66 = arith.constant 3.200000e+01 : f32
    %166 = arith.divf %165, %cst_66 : f32
    %c0_67 = arith.constant 0 : index
    %c0_68 = arith.constant 0 : index
    %167 = memref.load %arg15[%c0_67, %c0_68] : memref<1x1xf32, #tpu.memory_space<smem>>
    memref.store %166, %arg15[%c0_67, %c0_68] : memref<1x1xf32, #tpu.memory_space<smem>>
    return
  }
}

</mosaic_0001>

<llo_original>
// kernel: inspectionl_loss.1
$region0: #{inspectionl_loss.1}
  #allocation0 [shape = 'u32[]', space=smem, size = 0x4, offset = 0x4, fixed_abs, tag = 'smem constant byte address 0x4 - core index']
  #allocation1 [shape = 'u32[144,128]{1,0:T(1,128)}', space=vmem, size = 0x12000, scoped, tag = 'internal scratch']
  %s0 = inlined_call_operand.vmem [shape: bf16[16,16], index: 0, kind: input, shape index: {}]
  %s1 = inlined_call_operand.vmem [shape: f32[2,16,128], index: 1, kind: input, shape index: {}]
  %s2 = inlined_call_operand.hbm [shape: f32[128,128], index: 2, kind: input, shape index: {}]
  %s3 = inlined_call_operand.vmem [shape: f32[1,128], index: 3, kind: input, shape index: {}]
  %s4 = inlined_call_operand.vmem [shape: f32[1,128], index: 4, kind: input, shape index: {}]
  %s5 = inlined_call_operand.vmem [shape: f32[1,128], index: 5, kind: input, shape index: {}]
  %s6 = inlined_call_operand.hbm [shape: f32[128,128], index: 6, kind: input, shape index: {}]
  %s7 = inlined_call_operand.vmem [shape: f32[1,128], index: 7, kind: input, shape index: {}]
  %s8 = inlined_call_operand.hbm [shape: f32[128,128], index: 8, kind: input, shape index: {}]
  %s9 = inlined_call_operand.vmem [shape: f32[1,128], index: 9, kind: input, shape index: {}]
  %s10 = inlined_call_operand.vmem [shape: f32[1,128], index: 10, kind: input, shape index: {}]
  %s11 = inlined_call_operand.vmem [shape: f32[1,128], index: 11, kind: input, shape index: {}]
  %s12 = inlined_call_operand.hbm [shape: f32[128,128], index: 12, kind: input, shape index: {}]
  %s13 = inlined_call_operand.vmem [shape: f32[1,128], index: 13, kind: input, shape index: {}]
  %s14 = inlined_call_operand.hbm [shape: f32[128,128], index: 14, kind: input, shape index: {}]
  %s15 = inlined_call_operand.hbm [shape: f32[1,1], index: 15, kind: output, shape index: {}]
  %s16 = sld [smem:[#allocation0]]
  $region90: #{inspectionl_loss.1} parent=0
    _
  %s18 = ssub.s32 1, %s16
  %s19 = scalar_select 0, %s18, %s16
  $region1: #{inspectionl_loss.1} parent=0
    #allocation2 [shape = 'u8[65536]{0}', space=vmem, size = 0x10000, scoped, tag = 'input window, operand 2, single buffered']
    #allocation3 [shape = 's32[1]{0}', space=sflag, size = 0x4, scoped, tag = 'scoped memory for inspectionl_loss.1']
    #allocation4 [shape = 's32[1]{0}', space=sflag, size = 0x4, scoped, tag = 'scoped memory for inspectionl_loss.1']
    #allocation5 [shape = 'u8[65536]{0}', space=vmem, size = 0x10000, scoped, tag = 'input window, operand 6, single buffered']
    #allocation6 [shape = 's32[1]{0}', space=sflag, size = 0x4, scoped, tag = 'scoped memory for inspectionl_loss.1']
    #allocation7 [shape = 'u8[65536]{0}', space=vmem, size = 0x10000, scoped, tag = 'input window, operand 8, single buffered']
    #allocation8 [shape = 'u8[65536]{0}', space=vmem, size = 0x10000, scoped, tag = 'input window, operand 12, single buffered']
    #allocation9 [shape = 's32[1]{0}', space=sflag, size = 0x4, scoped, tag = 'scoped memory for inspectionl_loss.1']
    #allocation10 [shape = 'u8[65536]{0}', space=vmem, size = 0x10000, scoped, tag = 'input window, operand 14, single buffered']
    #allocation11 [shape = 'u8[512]{0}', space=smem, size = 0x200, scoped, tag = 'output window, operand 0, single buffered']
    %20 = vsyncpa [#allocation3], 0
    %21 = vsyncpa [#allocation6], 0
    %22 = vsyncpa [#allocation9], 0
    %23 = vsyncpa [#allocation4], 0
    // Predicated region
    $region2: #{inspectionl_loss.1} parent=1 // pred_check
      _
    $region3: #{inspectionl_loss.1} parent=1 // pred_check_branch
      %25 = sbr.rel (0) target = $region5
    $region4: #{inspectionl_loss.1} parent=1 // pred_region
      _
    $region5: #{inspectionl_loss.1} parent=1 // pred_fallthru
      _
    // Predicated region
    $region6: #{inspectionl_loss.1} parent=1 // pred_check
      _
    $region7: #{inspectionl_loss.1} parent=1 // pred_check_branch
      %27 = sbr.rel (0) target = $region9
    $region8: #{inspectionl_loss.1} parent=1 // pred_region
      _
    $region9: #{inspectionl_loss.1} parent=1 // pred_fallthru
      _
    // Predicated region
    $region10: #{inspectionl_loss.1} parent=1 // pred_check
      _
    $region11: #{inspectionl_loss.1} parent=1 // pred_check_branch
      %29 = sbr.rel (0) target = $region13
    $region12: #{inspectionl_loss.1} parent=1 // pred_region
      %s31 = ssub.s32 2048, 2048
      %32 = vsyncadd [#allocation3], %s31
      %s33 = sshll.u32 [#allocation2], 4
      %s34 = int_to_ptr.vmem [resolvable:$true] %s33
      %39 = dma.hbm_to_vmem [thread:$0]  %s2, 2048, %s34, [#allocation3], 128, 128, 8
    $region13: #{inspectionl_loss.1} parent=1 // pred_fallthru
      _
    // Predicated region
    $region14: #{inspectionl_loss.1} parent=1 // pred_check
      _
    $region15: #{inspectionl_loss.1} parent=1 // pred_check_branch
      %41 = sbr.rel (0) target = $region17
    $region16: #{inspectionl_loss.1} parent=1 // pred_region
      _
    $region17: #{inspectionl_loss.1} parent=1 // pred_fallthru
      _
    // Predicated region
    $region18: #{inspectionl_loss.1} parent=1 // pred_check
      _
    $region19: #{inspectionl_loss.1} parent=1 // pred_check_branch
      %43 = sbr.rel (0) target = $region21
    $region20: #{inspectionl_loss.1} parent=1 // pred_region
      _
    $region21: #{inspectionl_loss.1} parent=1 // pred_fallthru
      _
    // Predicated region
    $region22: #{inspectionl_loss.1} parent=1 // pred_check
      _
    $region23: #{inspectionl_loss.1} parent=1 // pred_check_branch
      %45 = sbr.rel (0) target = $region25
    $region24: #{inspectionl_loss.1} parent=1 // pred_region
      _
    $region25: #{inspectionl_loss.1} parent=1 // pred_fallthru
      _
    // Predicated region
    $region26: #{inspectionl_loss.1} parent=1 // pred_check
      _
    $region27: #{inspectionl_loss.1} parent=1 // pred_check_branch
      %47 = sbr.rel (0) target = $region29
    $region28: #{inspectionl_loss.1} parent=1 // pred_region
      %s49 = ssub.s32 2048, 2048
      %50 = vsyncadd [#allocation6], %s49
      %s51 = sshll.u32 [#allocation5], 4
      %s52 = int_to_ptr.vmem [resolvable:$true] %s51
      %57 = dma.hbm_to_vmem [thread:$0]  %s6, 2048, %s52, [#allocation6], 128, 128, 8
    $region29: #{inspectionl_loss.1} parent=1 // pred_fallthru
      _
    // Predicated region
    $region30: #{inspectionl_loss.1} parent=1 // pred_check
      _
    $region31: #{inspectionl_loss.1} parent=1 // pred_check_branch
      %59 = sbr.rel (0) target = $region33
    $region32: #{inspectionl_loss.1} parent=1 // pred_region
      _
    $region33: #{inspectionl_loss.1} parent=1 // pred_fallthru
      _
    // Predicated region
    $region34: #{inspectionl_loss.1} parent=1 // pred_check
      _
    $region35: #{inspectionl_loss.1} parent=1 // pred_check_branch
      %61 = sbr.rel (0) target = $region37
    $region36: #{inspectionl_loss.1} parent=1 // pred_region
      %s63 = ssub.s32 2048, 2048
      %64 = vsyncadd [#allocation6], %s63
      %s65 = sshll.u32 [#allocation7], 4
      %s66 = int_to_ptr.vmem [resolvable:$true] %s65
      %71 = dma.hbm_to_vmem [thread:$0]  %s8, 2048, %s66, [#allocation6], 128, 128, 8
    $region37: #{inspectionl_loss.1} parent=1 // pred_fallthru
      _
    // Predicated region
    $region38: #{inspectionl_loss.1} parent=1 // pred_check
      _
    $region39: #{inspectionl_loss.1} parent=1 // pred_check_branch
      %73 = sbr.rel (0) target = $region41
    $region40: #{inspectionl_loss.1} parent=1 // pred_region
      _
    $region41: #{inspectionl_loss.1} parent=1 // pred_fallthru
      _
    // Predicated region
    $region42: #{inspectionl_loss.1} parent=1 // pred_check
      _
    $region43: #{inspectionl_loss.1} parent=1 // pred_check_branch
      %75 = sbr.rel (0) target = $region45
    $region44: #{inspectionl_loss.1} parent=1 // pred_region
      _
    $region45: #{inspectionl_loss.1} parent=1 // pred_fallthru
      _
    // Predicated region
    $region46: #{inspectionl_loss.1} parent=1 // pred_check
      _
    $region47: #{inspectionl_loss.1} parent=1 // pred_check_branch
      %77 = sbr.rel (0) target = $region49
    $region48: #{inspectionl_loss.1} parent=1 // pred_region
      _
    $region49: #{inspectionl_loss.1} parent=1 // pred_fallthru
      _
    // Predicated region
    $region50: #{inspectionl_loss.1} parent=1 // pred_check
      _
    $region51: #{inspectionl_loss.1} parent=1 // pred_check_branch
      %79 = sbr.rel (0) target = $region53
    $region52: #{inspectionl_loss.1} parent=1 // pred_region
      %s81 = ssub.s32 2048, 2048
      %82 = vsyncadd [#allocation9], %s81
      %s83 = sshll.u32 [#allocation8], 4
      %s84 = int_to_ptr.vmem [resolvable:$true] %s83
      %89 = dma.hbm_to_vmem [thread:$0]  %s12, 2048, %s84, [#allocation9], 128, 128, 8
    $region53: #{inspectionl_loss.1} parent=1 // pred_fallthru
      _
    // Predicated region
    $region54: #{inspectionl_loss.1} parent=1 // pred_check
      _
    $region55: #{inspectionl_loss.1} parent=1 // pred_check_branch
      %91 = sbr.rel (0) target = $region57
    $region56: #{inspectionl_loss.1} parent=1 // pred_region
      _
    $region57: #{inspectionl_loss.1} parent=1 // pred_fallthru
      _
    // Predicated region
    $region58: #{inspectionl_loss.1} parent=1 // pred_check
      _
    $region59: #{inspectionl_loss.1} parent=1 // pred_check_branch
      %93 = sbr.rel (0) target = $region61
    $region60: #{inspectionl_loss.1} parent=1 // pred_region
      %s95 = ssub.s32 2048, 2048
      %96 = vsyncadd [#allocation9], %s95
      %s97 = sshll.u32 [#allocation10], 4
      %s98 = int_to_ptr.vmem [resolvable:$true] %s97
      %103 = dma.hbm_to_vmem [thread:$0]  %s14, 2048, %s98, [#allocation9], 128, 128, 8
    $region61: #{inspectionl_loss.1} parent=1 // pred_fallthru
      _
    // Predicated region
    $region62: #{inspectionl_loss.1} parent=1 // pred_check
      _
    $region63: #{inspectionl_loss.1} parent=1 // pred_check_branch
      %105 = sbr.rel (0) target = $region65
    $region64: #{inspectionl_loss.1} parent=1 // pred_region
      %106 = dma.done [#allocation3], 2048
    $region65: #{inspectionl_loss.1} parent=1 // pred_fallthru
      _
    // Predicated region
    $region66: #{inspectionl_loss.1} parent=1 // pred_check
      _
    $region67: #{inspectionl_loss.1} parent=1 // pred_check_branch
      %108 = sbr.rel (0) target = $region69
    $region68: #{inspectionl_loss.1} parent=1 // pred_region
      %109 = dma.done [#allocation6], 2048
    $region69: #{inspectionl_loss.1} parent=1 // pred_fallthru
      _
    // Predicated region
    $region70: #{inspectionl_loss.1} parent=1 // pred_check
      _
    $region71: #{inspectionl_loss.1} parent=1 // pred_check_branch
      %111 = sbr.rel (0) target = $region73
    $region72: #{inspectionl_loss.1} parent=1 // pred_region
      %112 = dma.done [#allocation6], 2048
    $region73: #{inspectionl_loss.1} parent=1 // pred_fallthru
      _
    // Predicated region
    $region74: #{inspectionl_loss.1} parent=1 // pred_check
      _
    $region75: #{inspectionl_loss.1} parent=1 // pred_check_branch
      %114 = sbr.rel (0) target = $region77
    $region76: #{inspectionl_loss.1} parent=1 // pred_region
      %115 = dma.done [#allocation9], 2048
    $region77: #{inspectionl_loss.1} parent=1 // pred_fallthru
      _
    // Predicated region
    $region78: #{inspectionl_loss.1} parent=1 // pred_check
      _
    $region79: #{inspectionl_loss.1} parent=1 // pred_check_branch
      %117 = sbr.rel (0) target = $region81
    $region80: #{inspectionl_loss.1} parent=1 // pred_region
      %118 = dma.done [#allocation9], 2048
    $region81: #{inspectionl_loss.1} parent=1 // pred_fallthru
      _
    %v120 = vld [vmem:[%s0] sm:$0xf]
    %v121 = vld [vmem:[%s0 + $0x4] sm:$0xf]
    %v122 = vld [vmem:[%s1] sm:$0xff]
    %v123 = vld [vmem:[%s1 + $0x8] sm:$0xff]
    %v124 = vld [vmem:[%s1 + $0x10] sm:$0xff]
    %v125 = vld [vmem:[%s1 + $0x18] sm:$0xff]
    %v126 = vpack.c.bf16 %v123, %v122
    %v127 = vpack.c.bf16 %v125, %v124
    %v130 = vunpack.c.l.b16 %v120
    %v131 = vunpack.c.l.b16 %v121
    %v132 = vpack.c.b16 %v131, %v130
    %vm133 = vcmask 130048
    %v135 = vsel %vm133, %v132, 0
    %137 = vmatprep.subr.bf16.mxu0 0
    %138 = vmatpush1.bf16.msra.mxu0 %v126
    %139 = vmatprep.subr.bf16.mxu0 0
    %140 = vmatpush1.bf16.msra.mxu0 0
    %141 = vmatprep.subr.bf16.mxu0 0
    %142 = vmatpush1.bf16.msra.mxu0 0
    %143 = vmatprep.subr.bf16.mxu0 0
    %144 = vmatpush1.bf16.msra.mxu0 0
    %145 = vmatprep.subr.bf16.mxu0 0
    %146 = vmatpush1.bf16.msra.mxu0 0
    %147 = vmatprep.subr.bf16.mxu0 0
    %148 = vmatpush1.bf16.msra.mxu0 0
    %149 = vmatprep.subr.bf16.mxu0 0
    %150 = vmatpush1.bf16.msra.mxu0 0
    %151 = vmatprep.subr.bf16.mxu0 0
    %152 = vmatpush1.bf16.msra.mxu0 0
    %153 = vmatprep.subr.bf16.mxu0 0
    %154 = vmatpush1.bf16.msra.mxu0 0
    %155 = vmatprep.subr.bf16.mxu0 0
    %156 = vmatpush1.bf16.msra.mxu0 0
    %157 = vmatprep.subr.bf16.mxu0 0
    %158 = vmatpush1.bf16.msra.mxu0 0
    %159 = vmatprep.subr.bf16.mxu0 0
    %160 = vmatpush1.bf16.msra.mxu0 0
    %161 = vmatprep.subr.bf16.mxu0 0
    %162 = vmatpush1.bf16.msra.mxu0 0
    %163 = vmatprep.subr.bf16.mxu0 0
    %164 = vmatpush1.bf16.msra.mxu0 0
    %165 = vmatprep.subr.bf16.mxu0 0
    %166 = vmatpush1.bf16.msra.mxu0 0
    %167 = vmatprep.subr.bf16.mxu0 0
    %168 = vmatpush1.bf16.msra.mxu0 0
    %169 = vmatprep.mubr.bf16.mxu0 0
    %170 = vmatmul.mubr.bf16.gmra.mrb[0].mxu0 %v135
    %v171 = vpop.f32.mrb[0].mxu0
    %v172 = vadd.f32 0.0, %v171
    %v173 = vpop.f32.mrb[0].mxu0
    %v174 = vpop.f32.mrb[0].mxu0
    %v175 = vadd.f32 0.0, %v174
    %v176 = vpop.f32.mrb[0].mxu0
    %177 = vdwg.mxu0
    %178 = vmatprep.subr.bf16.mxu0 0
    %179 = vmatpush1.bf16.msra.mxu0 %v127
    %180 = vmatprep.subr.bf16.mxu0 0
    %181 = vmatpush1.bf16.msra.mxu0 0
    %182 = vmatprep.subr.bf16.mxu0 0
    %183 = vmatpush1.bf16.msra.mxu0 0
    %184 = vmatprep.subr.bf16.mxu0 0
    %185 = vmatpush1.bf16.msra.mxu0 0
    %186 = vmatprep.subr.bf16.mxu0 0
    %187 = vmatpush1.bf16.msra.mxu0 0
    %188 = vmatprep.subr.bf16.mxu0 0
    %189 = vmatpush1.bf16.msra.mxu0 0
    %190 = vmatprep.subr.bf16.mxu0 0
    %191 = vmatpush1.bf16.msra.mxu0 0
    %192 = vmatprep.subr.bf16.mxu0 0
    %193 = vmatpush1.bf16.msra.mxu0 0
    %194 = vmatprep.subr.bf16.mxu0 0
    %195 = vmatpush1.bf16.msra.mxu0 0
    %196 = vmatprep.subr.bf16.mxu0 0
    %197 = vmatpush1.bf16.msra.mxu0 0
    %198 = vmatprep.subr.bf16.mxu0 0
    %199 = vmatpush1.bf16.msra.mxu0 0
    %200 = vmatprep.subr.bf16.mxu0 0
    %201 = vmatpush1.bf16.msra.mxu0 0
    %202 = vmatprep.subr.bf16.mxu0 0
    %203 = vmatpush1.bf16.msra.mxu0 0
    %204 = vmatprep.subr.bf16.mxu0 0
    %205 = vmatpush1.bf16.msra.mxu0 0
    %206 = vmatprep.subr.bf16.mxu0 0
    %207 = vmatpush1.bf16.msra.mxu0 0
    %208 = vmatprep.subr.bf16.mxu0 0
    %209 = vmatpush1.bf16.msra.mxu0 0
    %210 = vmatprep.mubr.bf16.mxu0 0
    %211 = vmatmul.mubr.bf16.gmra.mrb[0].mxu0 %v135
    %v212 = vpop.f32.mrb[0].mxu0
    %v213 = vadd.f32 0.0, %v212
    %v214 = vpop.f32.mrb[0].mxu0
    %v215 = vpop.f32.mrb[0].mxu0
    %v216 = vadd.f32 0.0, %v215
    %v217 = vpop.f32.mrb[0].mxu0
    %218 = vdwg.mxu0
    %v219 = vadd.f32 %v122, %v172
    %v220 = vadd.f32 %v123, %v175
    %v221 = vadd.f32 %v124, %v213
    %v222 = vadd.f32 %v125, %v216
    %v223 = vpack.c.bf16 %v220, %v219
    %v224 = vpack.c.bf16 %v222, %v221
    %v225 = vld [vmem:[#allocation2] sm:$0xff]
    %v226 = vld [vmem:[#allocation2 + $0x8] sm:$0xff]
    %v227 = vld [vmem:[#allocation2 + $0x10] sm:$0xff]
    %v228 = vld [vmem:[#allocation2 + $0x18] sm:$0xff]
    %v229 = vld [vmem:[#allocation2 + $0x20] sm:$0xff]
    %v230 = vld [vmem:[#allocation2 + $0x28] sm:$0xff]
    %v231 = vld [vmem:[#allocation2 + $0x30] sm:$0xff]
    %v232 = vld [vmem:[#allocation2 + $0x38] sm:$0xff]
    %v233 = vld [vmem:[#allocation2 + $0x40] sm:$0xff]
    %v234 = vld [vmem:[#allocation2 + $0x48] sm:$0xff]
    %v235 = vld [vmem:[#allocation2 + $0x50] sm:$0xff]
    %v236 = vld [vmem:[#allocation2 + $0x58] sm:$0xff]
    %v237 = vld [vmem:[#allocation2 + $0x60] sm:$0xff]
    %v238 = vld [vmem:[#allocation2 + $0x68] sm:$0xff]
    %v239 = vld [vmem:[#allocation2 + $0x70] sm:$0xff]
    %v240 = vld [vmem:[#allocation2 + $0x78] sm:$0xff]
    %v241 = vpack.c.bf16 %v226, %v225
    %v242 = vpack.c.bf16 %v228, %v227
    %v243 = vpack.c.bf16 %v230, %v229
    %v244 = vpack.c.bf16 %v232, %v231
    %v245 = vpack.c.bf16 %v234, %v233
    %v246 = vpack.c.bf16 %v236, %v235
    %v247 = vpack.c.bf16 %v238, %v237
    %v248 = vpack.c.bf16 %v240, %v239
    %v249 = vld [vmem:[%s3] sm:$0x1]
    %v251 = vlaneseq
    %v252 = vshrl.u32 %v251, 7
    %v253 = vsub.s32 0, %v252
    %v254 = vrot.slane %v249, %v253
    %256 = vmatprep.subr.bf16.mxu0 0
    %257 = vmatpush1.bf16.msra.mxu0 %v241
    %258 = vmatprep.subr.bf16.mxu0 0
    %259 = vmatpush1.bf16.msra.mxu0 %v242
    %260 = vmatprep.subr.bf16.mxu0 0
    %261 = vmatpush1.bf16.msra.mxu0 %v243
    %262 = vmatprep.subr.bf16.mxu0 0
    %263 = vmatpush1.bf16.msra.mxu0 %v244
    %264 = vmatprep.subr.bf16.mxu0 0
    %265 = vmatpush1.bf16.msra.mxu0 %v245
    %266 = vmatprep.subr.bf16.mxu0 0
    %267 = vmatpush1.bf16.msra.mxu0 %v246
    %268 = vmatprep.subr.bf16.mxu0 0
    %269 = vmatpush1.bf16.msra.mxu0 %v247
    %270 = vmatprep.subr.bf16.mxu0 0
    %271 = vmatpush1.bf16.msra.mxu0 %v248
    %272 = vmatprep.subr.bf16.mxu0 0
    %273 = vmatpush1.bf16.msra.mxu0 0
    %274 = vmatprep.subr.bf16.mxu0 0
    %275 = vmatpush1.bf16.msra.mxu0 0
    %276 = vmatprep.subr.bf16.mxu0 0
    %277 = vmatpush1.bf16.msra.mxu0 0
    %278 = vmatprep.subr.bf16.mxu0 0
    %279 = vmatpush1.bf16.msra.mxu0 0
    %280 = vmatprep.subr.bf16.mxu0 0
    %281 = vmatpush1.bf16.msra.mxu0 0
    %282 = vmatprep.subr.bf16.mxu0 0
    %283 = vmatpush1.bf16.msra.mxu0 0
    %284 = vmatprep.subr.bf16.mxu0 0
    %285 = vmatpush1.bf16.msra.mxu0 0
    %286 = vmatprep.subr.bf16.mxu0 0
    %287 = vmatpush1.bf16.msra.mxu0 0
    %288 = vmatprep.mubr.bf16.mxu0 0
    %289 = vmatmul.mubr.bf16.gmra.mrb[0].mxu0 %v223
    %v290 = vpop.f32.mrb[0].mxu0
    %v291 = vadd.f32 %v254, %v290
    %v292 = vpop.f32.mrb[0].mxu0
    %v293 = vpop.f32.mrb[0].mxu0
    %v294 = vadd.f32 %v254, %v293
    %v295 = vpop.f32.mrb[0].mxu0
    %296 = vmatprep.mubr.bf16.mxu0 0
    %297 = vmatmul.mubr.bf16.gmra.mrb[0].mxu0 %v224
    %v298 = vpop.f32.mrb[0].mxu0
    %v299 = vadd.f32 %v254, %v298
    %v300 = vpop.f32.mrb[0].mxu0
    %v301 = vpop.f32.mrb[0].mxu0
    %v302 = vadd.f32 %v254, %v301
    %v303 = vpop.f32.mrb[0].mxu0
    %304 = vdwg.mxu0
    %v305 = vadd.f32 %v291, %v294
    %v306 = vrot.slane %v305, 4
    %v307 = vadd.f32 %v305, %v306
    %v308 = vrot.slane %v307, 2
    %v309 = vadd.f32 %v307, %v308
    %v310 = vrot.slane %v309, 1
    %v311 = vadd.f32 %v309, %v310
    %v312 = vadd.f32 %v299, %v302
    %v313 = vrot.slane %v312, 4
    %v314 = vadd.f32 %v312, %v313
    %v315 = vrot.slane %v314, 2
    %v316 = vadd.f32 %v314, %v315
    %v317 = vrot.slane %v316, 1
    %v318 = vadd.f32 %v316, %v317
    %v319 = vrcp.pop 16.0
    %v320 = vmul.f32 %v311, %v319
    %v321 = vmul.f32 %v318, %v319
    %v322 = vsub.f32 %v291, %v320
    %v323 = vsub.f32 %v294, %v320
    %v324 = vsub.f32 %v299, %v321
    %v325 = vsub.f32 %v302, %v321
    %v326 = vmul.f32 %v322, %v322
    %v327 = vmul.f32 %v323, %v323
    %v328 = vmul.f32 %v324, %v324
    %v329 = vmul.f32 %v325, %v325
    %v330 = vadd.f32 %v326, %v327
    %v331 = vrot.slane %v330, 4
    %v332 = vadd.f32 %v330, %v331
    %v333 = vrot.slane %v332, 2
    %v334 = vadd.f32 %v332, %v333
    %v335 = vrot.slane %v334, 1
    %v336 = vadd.f32 %v334, %v335
    %v337 = vadd.f32 %v328, %v329
    %v338 = vrot.slane %v337, 4
    %v339 = vadd.f32 %v337, %v338
    %v340 = vrot.slane %v339, 2
    %v341 = vadd.f32 %v339, %v340
    %v342 = vrot.slane %v341, 1
    %v343 = vadd.f32 %v341, %v342
    %v344 = vmul.f32 %v336, %v319
    %v345 = vmul.f32 %v343, %v319
    %v346 = vadd.f32 %v344, 1e-05
    %v347 = vadd.f32 %v345, 1e-05
    %v348 = vrsqrt.pop %v346
    %v349 = vrsqrt.pop %v347
    %v350 = vmul.f32 %v322, %v348
    %v351 = vmul.f32 %v323, %v348
    %v352 = vmul.f32 %v324, %v349
    %v353 = vmul.f32 %v325, %v349
    %v354 = vld [vmem:[%s4] sm:$0x1]
    %v356 = vlaneseq
    %v357 = vshrl.u32 %v356, 7
    %v358 = vsub.s32 0, %v357
    %v359 = vrot.slane %v354, %v358
    %v361 = vmul.f32 %v350, %v359
    %v362 = vmul.f32 %v351, %v359
    %v363 = vmul.f32 %v352, %v359
    %v364 = vmul.f32 %v353, %v359
    %v365 = vld [vmem:[%s5] sm:$0x1]
    %v367 = vlaneseq
    %v368 = vshrl.u32 %v367, 7
    %v369 = vsub.s32 0, %v368
    %v370 = vrot.slane %v365, %v369
    %v372 = vadd.f32 %v361, %v370
    %v373 = vadd.f32 %v362, %v370
    %v374 = vadd.f32 %v363, %v370
    %v375 = vadd.f32 %v364, %v370
    %v376 = vmax.f32 %v372, 0.0
    %v377 = vmax.f32 %v373, 0.0
    %v378 = vmax.f32 %v374, 0.0
    %v379 = vmax.f32 %v375, 0.0
    %v380 = vpack.c.bf16 %v377, %v376
    %v381 = vpack.c.bf16 %v379, %v378
    %v382 = vld [vmem:[#allocation5] sm:$0xff]
    %v383 = vld [vmem:[#allocation5 + $0x8] sm:$0xff]
    %v384 = vld [vmem:[#allocation5 + $0x10] sm:$0xff]
    %v385 = vld [vmem:[#allocation5 + $0x18] sm:$0xff]
    %v386 = vld [vmem:[#allocation5 + $0x20] sm:$0xff]
    %v387 = vld [vmem:[#allocation5 + $0x28] sm:$0xff]
    %v388 = vld [vmem:[#allocation5 + $0x30] sm:$0xff]
    %v389 = vld [vmem:[#allocation5 + $0x38] sm:$0xff]
    %v390 = vld [vmem:[#allocation5 + $0x40] sm:$0xff]
    %v391 = vld [vmem:[#allocation5 + $0x48] sm:$0xff]
    %v392 = vld [vmem:[#allocation5 + $0x50] sm:$0xff]
    %v393 = vld [vmem:[#allocation5 + $0x58] sm:$0xff]
    %v394 = vld [vmem:[#allocation5 + $0x60] sm:$0xff]
    %v395 = vld [vmem:[#allocation5 + $0x68] sm:$0xff]
    %v396 = vld [vmem:[#allocation5 + $0x70] sm:$0xff]
    %v397 = vld [vmem:[#allocation5 + $0x78] sm:$0xff]
    %v398 = vpack.c.bf16 %v383, %v382
    %v399 = vpack.c.bf16 %v385, %v384
    %v400 = vpack.c.bf16 %v387, %v386
    %v401 = vpack.c.bf16 %v389, %v388
    %v402 = vpack.c.bf16 %v391, %v390
    %v403 = vpack.c.bf16 %v393, %v392
    %v404 = vpack.c.bf16 %v395, %v394
    %v405 = vpack.c.bf16 %v397, %v396
    %v406 = vld [vmem:[%s7] sm:$0x1]
    %v408 = vlaneseq
    %v409 = vshrl.u32 %v408, 7
    %v410 = vsub.s32 0, %v409
    %v411 = vrot.slane %v406, %v410
    %413 = vmatprep.subr.bf16.mxu0 0
    %414 = vmatpush1.bf16.msra.mxu0 %v398
    %415 = vmatprep.subr.bf16.mxu0 0
    %416 = vmatpush1.bf16.msra.mxu0 %v399
    %417 = vmatprep.subr.bf16.mxu0 0
    %418 = vmatpush1.bf16.msra.mxu0 %v400
    %419 = vmatprep.subr.bf16.mxu0 0
    %420 = vmatpush1.bf16.msra.mxu0 %v401
    %421 = vmatprep.subr.bf16.mxu0 0
    %422 = vmatpush1.bf16.msra.mxu0 %v402
    %423 = vmatprep.subr.bf16.mxu0 0
    %424 = vmatpush1.bf16.msra.mxu0 %v403
    %425 = vmatprep.subr.bf16.mxu0 0
    %426 = vmatpush1.bf16.msra.mxu0 %v404
    %427 = vmatprep.subr.bf16.mxu0 0
    %428 = vmatpush1.bf16.msra.mxu0 %v405
    %429 = vmatprep.subr.bf16.mxu0 0
    %430 = vmatpush1.bf16.msra.mxu0 0
    %431 = vmatprep.subr.bf16.mxu0 0
    %432 = vmatpush1.bf16.msra.mxu0 0
    %433 = vmatprep.subr.bf16.mxu0 0
    %434 = vmatpush1.bf16.msra.mxu0 0
    %435 = vmatprep.subr.bf16.mxu0 0
    %436 = vmatpush1.bf16.msra.mxu0 0
    %437 = vmatprep.subr.bf16.mxu0 0
    %438 = vmatpush1.bf16.msra.mxu0 0
    %439 = vmatprep.subr.bf16.mxu0 0
    %440 = vmatpush1.bf16.msra.mxu0 0
    %441 = vmatprep.subr.bf16.mxu0 0
    %442 = vmatpush1.bf16.msra.mxu0 0
    %443 = vmatprep.subr.bf16.mxu0 0
    %444 = vmatpush1.bf16.msra.mxu0 0
    %445 = vmatprep.mubr.bf16.mxu0 0
    %446 = vmatmul.mubr.bf16.gmra.mrb[0].mxu0 %v380
    %v447 = vpop.f32.mrb[0].mxu0
    %v448 = vadd.f32 %v411, %v447
    %v449 = vpop.f32.mrb[0].mxu0
    %v450 = vpop.f32.mrb[0].mxu0
    %v451 = vadd.f32 %v411, %v450
    %v452 = vpop.f32.mrb[0].mxu0
    %453 = vmatprep.mubr.bf16.mxu0 0
    %454 = vmatmul.mubr.bf16.gmra.mrb[0].mxu0 %v381
    %v455 = vpop.f32.mrb[0].mxu0
    %v456 = vadd.f32 %v411, %v455
    %v457 = vpop.f32.mrb[0].mxu0
    %v458 = vpop.f32.mrb[0].mxu0
    %v459 = vadd.f32 %v411, %v458
    %v460 = vpop.f32.mrb[0].mxu0
    %461 = vdwg.mxu0
    %v462 = vmax.f32 %v448, 0.0
    %v463 = vmax.f32 %v451, 0.0
    %v464 = vmax.f32 %v456, 0.0
    %v465 = vmax.f32 %v459, 0.0
    %v466 = vpack.c.bf16 %v463, %v462
    %v467 = vpack.c.bf16 %v465, %v464
    %468 = vmatprep.subr.bf16.mxu0 0
    %469 = vmatpush1.bf16.msra.mxu0 %v466
    %470 = vmatprep.subr.bf16.mxu0 0
    %471 = vmatpush1.bf16.msra.mxu0 0
    %472 = vmatprep.subr.bf16.mxu0 0
    %473 = vmatpush1.bf16.msra.mxu0 0
    %474 = vmatprep.subr.bf16.mxu0 0
    %475 = vmatpush1.bf16.msra.mxu0 0
    %476 = vmatprep.subr.bf16.mxu0 0
    %477 = vmatpush1.bf16.msra.mxu0 0
    %478 = vmatprep.subr.bf16.mxu0 0
    %479 = vmatpush1.bf16.msra.mxu0 0
    %480 = vmatprep.subr.bf16.mxu0 0
    %481 = vmatpush1.bf16.msra.mxu0 0
    %482 = vmatprep.subr.bf16.mxu0 0
    %483 = vmatpush1.bf16.msra.mxu0 0
    %484 = vmatprep.subr.bf16.mxu0 0
    %485 = vmatpush1.bf16.msra.mxu0 0
    %486 = vmatprep.subr.bf16.mxu0 0
    %487 = vmatpush1.bf16.msra.mxu0 0
    %488 = vmatprep.subr.bf16.mxu0 0
    %489 = vmatpush1.bf16.msra.mxu0 0
    %490 = vmatprep.subr.bf16.mxu0 0
    %491 = vmatpush1.bf16.msra.mxu0 0
    %492 = vmatprep.subr.bf16.mxu0 0
    %493 = vmatpush1.bf16.msra.mxu0 0
    %494 = vmatprep.subr.bf16.mxu0 0
    %495 = vmatpush1.bf16.msra.mxu0 0
    %496 = vmatprep.subr.bf16.mxu0 0
    %497 = vmatpush1.bf16.msra.mxu0 0
    %498 = vmatprep.subr.bf16.mxu0 0
    %499 = vmatpush1.bf16.msra.mxu0 0
    %500 = vmatprep.mubr.bf16.mxu0 0
    %501 = vmatmul.mubr.bf16.gmra.mrb[0].mxu0 %v135
    %v502 = vpop.f32.mrb[0].mxu0
    %v503 = vadd.f32 0.0, %v502
    %v504 = vpop.f32.mrb[0].mxu0
    %v505 = vpop.f32.mrb[0].mxu0
    %v506 = vadd.f32 0.0, %v505
    %v507 = vpop.f32.mrb[0].mxu0
    %508 = vdwg.mxu0
    %509 = vmatprep.subr.bf16.mxu0 0
    %510 = vmatpush1.bf16.msra.mxu0 %v467
    %511 = vmatprep.subr.bf16.mxu0 0
    %512 = vmatpush1.bf16.msra.mxu0 0
    %513 = vmatprep.subr.bf16.mxu0 0
    %514 = vmatpush1.bf16.msra.mxu0 0
    %515 = vmatprep.subr.bf16.mxu0 0
    %516 = vmatpush1.bf16.msra.mxu0 0
    %517 = vmatprep.subr.bf16.mxu0 0
    %518 = vmatpush1.bf16.msra.mxu0 0
    %519 = vmatprep.subr.bf16.mxu0 0
    %520 = vmatpush1.bf16.msra.mxu0 0
    %521 = vmatprep.subr.bf16.mxu0 0
    %522 = vmatpush1.bf16.msra.mxu0 0
    %523 = vmatprep.subr.bf16.mxu0 0
    %524 = vmatpush1.bf16.msra.mxu0 0
    %525 = vmatprep.subr.bf16.mxu0 0
    %526 = vmatpush1.bf16.msra.mxu0 0
    %527 = vmatprep.subr.bf16.mxu0 0
    %528 = vmatpush1.bf16.msra.mxu0 0
    %529 = vmatprep.subr.bf16.mxu0 0
    %530 = vmatpush1.bf16.msra.mxu0 0
    %531 = vmatprep.subr.bf16.mxu0 0
    %532 = vmatpush1.bf16.msra.mxu0 0
    %533 = vmatprep.subr.bf16.mxu0 0
    %534 = vmatpush1.bf16.msra.mxu0 0
    %535 = vmatprep.subr.bf16.mxu0 0
    %536 = vmatpush1.bf16.msra.mxu0 0
    %537 = vmatprep.subr.bf16.mxu0 0
    %538 = vmatpush1.bf16.msra.mxu0 0
    %539 = vmatprep.subr.bf16.mxu0 0
    %540 = vmatpush1.bf16.msra.mxu0 0
    %541 = vmatprep.mubr.bf16.mxu0 0
    %542 = vmatmul.mubr.bf16.gmra.mrb[0].mxu0 %v135
    %v543 = vpop.f32.mrb[0].mxu0
    %v544 = vadd.f32 0.0, %v543
    %v545 = vpop.f32.mrb[0].mxu0
    %v546 = vpop.f32.mrb[0].mxu0
    %v547 = vadd.f32 0.0, %v546
    %v548 = vpop.f32.mrb[0].mxu0
    %549 = vdwg.mxu0
    %v550 = vadd.f32 %v462, %v503
    %v551 = vadd.f32 %v463, %v506
    %v552 = vadd.f32 %v464, %v544
    %v553 = vadd.f32 %v465, %v547
    %v554 = vpack.c.bf16 %v551, %v550
    %v555 = vpack.c.bf16 %v553, %v552
    %v556 = vld [vmem:[#allocation7] sm:$0xff]
    %v557 = vld [vmem:[#allocation7 + $0x8] sm:$0xff]
    %v558 = vld [vmem:[#allocation7 + $0x10] sm:$0xff]
    %v559 = vld [vmem:[#allocation7 + $0x18] sm:$0xff]
    %v560 = vld [vmem:[#allocation7 + $0x20] sm:$0xff]
    %v561 = vld [vmem:[#allocation7 + $0x28] sm:$0xff]
    %v562 = vld [vmem:[#allocation7 + $0x30] sm:$0xff]
    %v563 = vld [vmem:[#allocation7 + $0x38] sm:$0xff]
    %v564 = vld [vmem:[#allocation7 + $0x40] sm:$0xff]
    %v565 = vld [vmem:[#allocation7 + $0x48] sm:$0xff]
    %v566 = vld [vmem:[#allocation7 + $0x50] sm:$0xff]
    %v567 = vld [vmem:[#allocation7 + $0x58] sm:$0xff]
    %v568 = vld [vmem:[#allocation7 + $0x60] sm:$0xff]
    %v569 = vld [vmem:[#allocation7 + $0x68] sm:$0xff]
    %v570 = vld [vmem:[#allocation7 + $0x70] sm:$0xff]
    %v571 = vld [vmem:[#allocation7 + $0x78] sm:$0xff]
    %v572 = vpack.c.bf16 %v557, %v556
    %v573 = vpack.c.bf16 %v559, %v558
    %v574 = vpack.c.bf16 %v561, %v560
    %v575 = vpack.c.bf16 %v563, %v562
    %v576 = vpack.c.bf16 %v565, %v564
    %v577 = vpack.c.bf16 %v567, %v566
    %v578 = vpack.c.bf16 %v569, %v568
    %v579 = vpack.c.bf16 %v571, %v570
    %v580 = vld [vmem:[%s9] sm:$0x1]
    %v582 = vlaneseq
    %v583 = vshrl.u32 %v582, 7
    %v584 = vsub.s32 0, %v583
    %v585 = vrot.slane %v580, %v584
    %587 = vmatprep.subr.bf16.mxu0 0
    %588 = vmatpush1.bf16.msra.mxu0 %v572
    %589 = vmatprep.subr.bf16.mxu0 0
    %590 = vmatpush1.bf16.msra.mxu0 %v573
    %591 = vmatprep.subr.bf16.mxu0 0
    %592 = vmatpush1.bf16.msra.mxu0 %v574
    %593 = vmatprep.subr.bf16.mxu0 0
    %594 = vmatpush1.bf16.msra.mxu0 %v575
    %595 = vmatprep.subr.bf16.mxu0 0
    %596 = vmatpush1.bf16.msra.mxu0 %v576
    %597 = vmatprep.subr.bf16.mxu0 0
    %598 = vmatpush1.bf16.msra.mxu0 %v577
    %599 = vmatprep.subr.bf16.mxu0 0
    %600 = vmatpush1.bf16.msra.mxu0 %v578
    %601 = vmatprep.subr.bf16.mxu0 0
    %602 = vmatpush1.bf16.msra.mxu0 %v579
    %603 = vmatprep.subr.bf16.mxu0 0
    %604 = vmatpush1.bf16.msra.mxu0 0
    %605 = vmatprep.subr.bf16.mxu0 0
    %606 = vmatpush1.bf16.msra.mxu0 0
    %607 = vmatprep.subr.bf16.mxu0 0
    %608 = vmatpush1.bf16.msra.mxu0 0
    %609 = vmatprep.subr.bf16.mxu0 0
    %610 = vmatpush1.bf16.msra.mxu0 0
    %611 = vmatprep.subr.bf16.mxu0 0
    %612 = vmatpush1.bf16.msra.mxu0 0
    %613 = vmatprep.subr.bf16.mxu0 0
    %614 = vmatpush1.bf16.msra.mxu0 0
    %615 = vmatprep.subr.bf16.mxu0 0
    %616 = vmatpush1.bf16.msra.mxu0 0
    %617 = vmatprep.subr.bf16.mxu0 0
    %618 = vmatpush1.bf16.msra.mxu0 0
    %619 = vmatprep.mubr.bf16.mxu0 0
    %620 = vmatmul.mubr.bf16.gmra.mrb[0].mxu0 %v554
    %v621 = vpop.f32.mrb[0].mxu0
    %v622 = vadd.f32 %v585, %v621
    %v623 = vpop.f32.mrb[0].mxu0
    %v624 = vpop.f32.mrb[0].mxu0
    %v625 = vadd.f32 %v585, %v624
    %v626 = vpop.f32.mrb[0].mxu0
    %627 = vmatprep.mubr.bf16.mxu0 0
    %628 = vmatmul.mubr.bf16.gmra.mrb[0].mxu0 %v555
    %v629 = vpop.f32.mrb[0].mxu0
    %v630 = vadd.f32 %v585, %v629
    %v631 = vpop.f32.mrb[0].mxu0
    %v632 = vpop.f32.mrb[0].mxu0
    %v633 = vadd.f32 %v585, %v632
    %v634 = vpop.f32.mrb[0].mxu0
    %635 = vdwg.mxu0
    %v636 = vadd.f32 %v622, %v625
    %v637 = vrot.slane %v636, 4
    %v638 = vadd.f32 %v636, %v637
    %v639 = vrot.slane %v638, 2
    %v640 = vadd.f32 %v638, %v639
    %v641 = vrot.slane %v640, 1
    %v642 = vadd.f32 %v640, %v641
    %v643 = vadd.f32 %v630, %v633
    %v644 = vrot.slane %v643, 4
    %v645 = vadd.f32 %v643, %v644
    %v646 = vrot.slane %v645, 2
    %v647 = vadd.f32 %v645, %v646
    %v648 = vrot.slane %v647, 1
    %v649 = vadd.f32 %v647, %v648
    %v650 = vmul.f32 %v642, %v319
    %v651 = vmul.f32 %v649, %v319
    %v652 = vsub.f32 %v622, %v650
    %v653 = vsub.f32 %v625, %v650
    %v654 = vsub.f32 %v630, %v651
    %v655 = vsub.f32 %v633, %v651
    %v656 = vmul.f32 %v652, %v652
    %v657 = vmul.f32 %v653, %v653
    %v658 = vmul.f32 %v654, %v654
    %v659 = vmul.f32 %v655, %v655
    %v660 = vadd.f32 %v656, %v657
    %v661 = vrot.slane %v660, 4
    %v662 = vadd.f32 %v660, %v661
    %v663 = vrot.slane %v662, 2
    %v664 = vadd.f32 %v662, %v663
    %v665 = vrot.slane %v664, 1
    %v666 = vadd.f32 %v664, %v665
    %v667 = vadd.f32 %v658, %v659
    %v668 = vrot.slane %v667, 4
    %v669 = vadd.f32 %v667, %v668
    %v670 = vrot.slane %v669, 2
    %v671 = vadd.f32 %v669, %v670
    %v672 = vrot.slane %v671, 1
    %v673 = vadd.f32 %v671, %v672
    %v674 = vmul.f32 %v666, %v319
    %v675 = vmul.f32 %v673, %v319
    %v676 = vadd.f32 %v674, 1e-05
    %v677 = vadd.f32 %v675, 1e-05
    %v678 = vrsqrt.pop %v676
    %v679 = vrsqrt.pop %v677
    %v680 = vmul.f32 %v652, %v678
    %v681 = vmul.f32 %v653, %v678
    %v682 = vmul.f32 %v654, %v679
    %v683 = vmul.f32 %v655, %v679
    %v684 = vld [vmem:[%s10] sm:$0x1]
    %v686 = vlaneseq
    %v687 = vshrl.u32 %v686, 7
    %v688 = vsub.s32 0, %v687
    %v689 = vrot.slane %v684, %v688
    %v691 = vmul.f32 %v680, %v689
    %v692 = vmul.f32 %v681, %v689
    %v693 = vmul.f32 %v682, %v689
    %v694 = vmul.f32 %v683, %v689
    %v695 = vld [vmem:[%s11] sm:$0x1]
    %v697 = vlaneseq
    %v698 = vshrl.u32 %v697, 7
    %v699 = vsub.s32 0, %v698
    %v700 = vrot.slane %v695, %v699
    %v702 = vadd.f32 %v691, %v700
    %v703 = vadd.f32 %v692, %v700
    %v704 = vadd.f32 %v693, %v700
    %v705 = vadd.f32 %v694, %v700
    %v706 = vmax.f32 %v702, 0.0
    %v707 = vmax.f32 %v703, 0.0
    %v708 = vmax.f32 %v704, 0.0
    %v709 = vmax.f32 %v705, 0.0
    %v710 = vpack.c.bf16 %v707, %v706
    %v711 = vpack.c.bf16 %v709, %v708
    %v712 = vld [vmem:[#allocation8] sm:$0xff]
    %v713 = vld [vmem:[#allocation8 + $0x8] sm:$0xff]
    %v714 = vld [vmem:[#allocation8 + $0x10] sm:$0xff]
    %v715 = vld [vmem:[#allocation8 + $0x18] sm:$0xff]
    %v716 = vld [vmem:[#allocation8 + $0x20] sm:$0xff]
    %v717 = vld [vmem:[#allocation8 + $0x28] sm:$0xff]
    %v718 = vld [vmem:[#allocation8 + $0x30] sm:$0xff]
    %v719 = vld [vmem:[#allocation8 + $0x38] sm:$0xff]
    %v720 = vld [vmem:[#allocation8 + $0x40] sm:$0xff]
    %v721 = vld [vmem:[#allocation8 + $0x48] sm:$0xff]
    %v722 = vld [vmem:[#allocation8 + $0x50] sm:$0xff]
    %v723 = vld [vmem:[#allocation8 + $0x58] sm:$0xff]
    %v724 = vld [vmem:[#allocation8 + $0x60] sm:$0xff]
    %v725 = vld [vmem:[#allocation8 + $0x68] sm:$0xff]
    %v726 = vld [vmem:[#allocation8 + $0x70] sm:$0xff]
    %v727 = vld [vmem:[#allocation8 + $0x78] sm:$0xff]
    %v728 = vpack.c.bf16 %v713, %v712
    %v729 = vpack.c.bf16 %v715, %v714
    %v730 = vpack.c.bf16 %v717, %v716
    %v731 = vpack.c.bf16 %v719, %v718
    %v732 = vpack.c.bf16 %v721, %v720
    %v733 = vpack.c.bf16 %v723, %v722
    %v734 = vpack.c.bf16 %v725, %v724
    %v735 = vpack.c.bf16 %v727, %v726
    %v736 = vld [vmem:[%s13] sm:$0x1]
    %v738 = vlaneseq
    %v739 = vshrl.u32 %v738, 7
    %v740 = vsub.s32 0, %v739
    %v741 = vrot.slane %v736, %v740
    %743 = vmatprep.subr.bf16.mxu0 0
    %744 = vmatpush1.bf16.msra.mxu0 %v728
    %745 = vmatprep.subr.bf16.mxu0 0
    %746 = vmatpush1.bf16.msra.mxu0 %v729
    %747 = vmatprep.subr.bf16.mxu0 0
    %748 = vmatpush1.bf16.msra.mxu0 %v730
    %749 = vmatprep.subr.bf16.mxu0 0
    %750 = vmatpush1.bf16.msra.mxu0 %v731
    %751 = vmatprep.subr.bf16.mxu0 0
    %752 = vmatpush1.bf16.msra.mxu0 %v732
    %753 = vmatprep.subr.bf16.mxu0 0
    %754 = vmatpush1.bf16.msra.mxu0 %v733
    %755 = vmatprep.subr.bf16.mxu0 0
    %756 = vmatpush1.bf16.msra.mxu0 %v734
    %757 = vmatprep.subr.bf16.mxu0 0
    %758 = vmatpush1.bf16.msra.mxu0 %v735
    %759 = vmatprep.subr.bf16.mxu0 0
    %760 = vmatpush1.bf16.msra.mxu0 0
    %761 = vmatprep.subr.bf16.mxu0 0
    %762 = vmatpush1.bf16.msra.mxu0 0
    %763 = vmatprep.subr.bf16.mxu0 0
    %764 = vmatpush1.bf16.msra.mxu0 0
    %765 = vmatprep.subr.bf16.mxu0 0
    %766 = vmatpush1.bf16.msra.mxu0 0
    %767 = vmatprep.subr.bf16.mxu0 0
    %768 = vmatpush1.bf16.msra.mxu0 0
    %769 = vmatprep.subr.bf16.mxu0 0
    %770 = vmatpush1.bf16.msra.mxu0 0
    %771 = vmatprep.subr.bf16.mxu0 0
    %772 = vmatpush1.bf16.msra.mxu0 0
    %773 = vmatprep.subr.bf16.mxu0 0
    %774 = vmatpush1.bf16.msra.mxu0 0
    %775 = vmatprep.mubr.bf16.mxu0 0
    %776 = vmatmul.mubr.bf16.gmra.mrb[0].mxu0 %v710
    %v777 = vpop.f32.mrb[0].mxu0
    %v778 = vadd.f32 %v741, %v777
    %v779 = vpop.f32.mrb[0].mxu0
    %v780 = vpop.f32.mrb[0].mxu0
    %v781 = vadd.f32 %v741, %v780
    %v782 = vpop.f32.mrb[0].mxu0
    %783 = vmatprep.mubr.bf16.mxu0 0
    %784 = vmatmul.mubr.bf16.gmra.mrb[0].mxu0 %v711
    %v785 = vpop.f32.mrb[0].mxu0
    %v786 = vadd.f32 %v741, %v785
    %v787 = vpop.f32.mrb[0].mxu0
    %v788 = vpop.f32.mrb[0].mxu0
    %v789 = vadd.f32 %v741, %v788
    %v790 = vpop.f32.mrb[0].mxu0
    %791 = vdwg.mxu0
    %v792 = vmax.f32 %v778, 0.0
    %v793 = vmax.f32 %v781, 0.0
    %v794 = vmax.f32 %v786, 0.0
    %v795 = vmax.f32 %v789, 0.0
    %v796 = vadd.f32 %v792, %v793
    %v797 = vrot.slane %v796, 4
    %v798 = vadd.f32 %v796, %v797
    %v799 = vrot.slane %v798, 2
    %v800 = vadd.f32 %v798, %v799
    %v801 = vrot.slane %v800, 1
    %v802 = vadd.f32 %v800, %v801
    %v803 = vmul.f32 %v802, %v319
    %v804 = vxor.u32 %v803, 2147483648
    %v805 = vmul.f32 %v804, 1.442695
    %v806 = vpow.pop %v805
    %v807 = vadd.f32 %v806, 1.0
    %v808 = vrcp.pop %v807
    %v809 = vmul.f32 1.0, %v808
    %v810 = vld [vmem:[#allocation10] sm:$0xff]
    %v811 = vld [vmem:[#allocation10 + $0x8] sm:$0xff]
    %v812 = vld [vmem:[#allocation10 + $0x10] sm:$0xff]
    %v813 = vld [vmem:[#allocation10 + $0x18] sm:$0xff]
    %v814 = vld [vmem:[#allocation10 + $0x20] sm:$0xff]
    %v815 = vld [vmem:[#allocation10 + $0x28] sm:$0xff]
    %v816 = vld [vmem:[#allocation10 + $0x30] sm:$0xff]
    %v817 = vld [vmem:[#allocation10 + $0x38] sm:$0xff]
    %v818 = vld [vmem:[#allocation10 + $0x40] sm:$0xff]
    %v819 = vld [vmem:[#allocation10 + $0x48] sm:$0xff]
    %v820 = vld [vmem:[#allocation10 + $0x50] sm:$0xff]
    %v821 = vld [vmem:[#allocation10 + $0x58] sm:$0xff]
    %v822 = vld [vmem:[#allocation10 + $0x60] sm:$0xff]
    %v823 = vld [vmem:[#allocation10 + $0x68] sm:$0xff]
    %v824 = vld [vmem:[#allocation10 + $0x70] sm:$0xff]
    %v825 = vld [vmem:[#allocation10 + $0x78] sm:$0xff]
    %826 = vmatprep.subr.mxu0 0.0
    %827 = vmatpush1.msra.mxu0 %v810
    %828 = vmatprep.subr.mxu0 0.0
    %829 = vmatpush1.msra.mxu0 %v811
    %830 = vmatprep.subr.mxu0 0.0
    %831 = vmatpush1.msra.mxu0 %v812
    %832 = vmatprep.subr.mxu0 0.0
    %833 = vmatpush1.msra.mxu0 %v813
    %834 = vmatprep.subr.mxu0 0.0
    %835 = vmatpush1.msra.mxu0 %v814
    %836 = vmatprep.subr.mxu0 0.0
    %837 = vmatpush1.msra.mxu0 %v815
    %838 = vmatprep.subr.mxu0 0.0
    %839 = vmatpush1.msra.mxu0 %v816
    %840 = vmatprep.subr.mxu0 0.0
    %841 = vmatpush1.msra.mxu0 %v817
    %842 = vmatprep.subr.mxu0 0.0
    %843 = vmatpush1.msra.mxu0 %v818
    %844 = vmatprep.subr.mxu0 0.0
    %845 = vmatpush1.msra.mxu0 %v819
    %846 = vmatprep.subr.mxu0 0.0
    %847 = vmatpush1.msra.mxu0 %v820
    %848 = vmatprep.subr.mxu0 0.0
    %849 = vmatpush1.msra.mxu0 %v821
    %850 = vmatprep.subr.mxu0 0.0
    %851 = vmatpush1.msra.mxu0 %v822
    %852 = vmatprep.subr.mxu0 0.0
    %853 = vmatpush1.msra.mxu0 %v823
    %854 = vmatprep.subr.mxu0 0.0
    %855 = vmatpush1.msra.mxu0 %v824
    %856 = vmatprep.subr.mxu0 0.0
    %857 = vmatpush1.msra.mxu0 %v825
    %858 = vmatprep.subr.mxu0 0.0
    %859 = vmatpush1.msra.mxu0 0.0
    %860 = vmatprep.subr.mxu0 0.0
    %861 = vmatpush1.msra.mxu0 0.0
    %862 = vmatprep.subr.mxu0 0.0
    %863 = vmatpush1.msra.mxu0 0.0
    %864 = vmatprep.subr.mxu0 0.0
    %865 = vmatpush1.msra.mxu0 0.0
    %866 = vmatprep.subr.mxu0 0.0
    %867 = vmatpush1.msra.mxu0 0.0
    %868 = vmatprep.subr.mxu0 0.0
    %869 = vmatpush1.msra.mxu0 0.0
    %870 = vmatprep.subr.mxu0 0.0
    %871 = vmatpush1.msra.mxu0 0.0
    %872 = vmatprep.subr.mxu0 0.0
    %873 = vmatpush1.msra.mxu0 0.0
    %874 = vmatprep.subr.mxu0 0.0
    %875 = vmatpush1.msra.mxu0 0.0
    %876 = vmatprep.subr.mxu0 0.0
    %877 = vmatpush1.msra.mxu0 0.0
    %878 = vmatprep.subr.mxu0 0.0
    %879 = vmatpush1.msra.mxu0 0.0
    %880 = vmatprep.subr.mxu0 0.0
    %881 = vmatpush1.msra.mxu0 0.0
    %882 = vmatprep.subr.mxu0 0.0
    %883 = vmatpush1.msra.mxu0 0.0
    %884 = vmatprep.subr.mxu0 0.0
    %885 = vmatpush1.msra.mxu0 0.0
    %886 = vmatprep.subr.mxu0 0.0
    %887 = vmatpush1.msra.mxu0 0.0
    %888 = vmatprep.subr.mxu0 0.0
    %889 = vmatpush1.msra.mxu0 0.0
    %890 = vmatprep.mubr.f32.mxu0 0.0
    %891 = vmatmul.mubr.f32.gmra.mrb[0].mxu0 %v809
    %v892 = vpop.f32.mrb[0].mxu0
    %v893 = vadd.f32 0.0, %v892
    %v894 = vpop.f32.mrb[0].mxu0
    %895 = vdwg.mxu0
    %v896 = vlaneseq
    %v897 = vshrl.u32 %v896, 7
    %v898 = vsub.s32 0, %v897
    %v899 = vrot.slane %v893, %v898
    %v900 = vmul.f32 %v792, %v899
    %v901 = vmul.f32 %v793, %v899
    %902 = vadd.xlane.f32.xlu0 %v900
    %v903 = vpop.xlane.xlu0 %902
    %904 = vadd.xlane.f32.xlu0 %v901
    %v905 = vpop.xlane.xlu0 %904
    %v906 = vmul.f32 %v794, %v899
    %v907 = vmul.f32 %v795, %v899
    %908 = vadd.xlane.f32.xlu0 %v906
    %v909 = vpop.xlane.xlu0 %908
    %910 = vadd.xlane.f32.xlu0 %v907
    %v911 = vpop.xlane.xlu0 %910
    %v912 = vsub.f32 0.0, %v903
    %v913 = vsub.f32 0.0, %v905
    %v914 = vmax.f32 %v912, 0.0
    %v915 = vmax.f32 %v913, 0.0
    %v916 = vand.u32 2147483647, %v912
    %v917 = vand.u32 2147483647, %v913
    %v918 = vsub.f32 0.0, %v916
    %v919 = vsub.f32 0.0, %v917
    %v920 = vmul.f32 %v918, 1.442695
    %v921 = vpow.pop %v920
    %v922 = vmul.f32 %v919, 1.442695
    %v923 = vpow.pop %v922
    %v924 = vadd.f32 %v921, 1.0
    %v925 = vlog2.pop %v924
    %v926 = vmul.f32 %v925, 0.6931472
    %v927 = vmul.f32 -0.5, %v921
    %v928 = vadd.f32 %v927, 1.0
    %v929 = vmul.f32 %v928, %v921
    %v930 = vand.u32 2147483647, %v921
    %vm931 = vcmp.lt.f32.partialorder %v930, 0.0004427343
    %v932 = vsel %vm931, %v929, %v926
    %v933 = vadd.f32 %v923, 1.0
    %v934 = vlog2.pop %v933
    %v935 = vmul.f32 %v934, 0.6931472
    %v936 = vmul.f32 -0.5, %v923
    %v937 = vadd.f32 %v936, 1.0
    %v938 = vmul.f32 %v937, %v923
    %v939 = vand.u32 2147483647, %v923
    %vm940 = vcmp.lt.f32.partialorder %v939, 0.0004427343
    %v941 = vsel %vm940, %v938, %v935
    %v942 = vadd.f32 %v914, %v932
    %v943 = vadd.f32 %v915, %v941
    %v944 = vmin.f32 %v942, 100.0
    %v945 = vmin.f32 %v943, 100.0
    %v946 = vmax.f32 %v909, 0.0
    %v947 = vmax.f32 %v911, 0.0
    %v948 = vand.u32 2147483647, %v909
    %v949 = vand.u32 2147483647, %v911
    %v950 = vsub.f32 0.0, %v948
    %v951 = vsub.f32 0.0, %v949
    %v952 = vmul.f32 %v950, 1.442695
    %v953 = vpow.pop %v952
    %v954 = vmul.f32 %v951, 1.442695
    %v955 = vpow.pop %v954
    %v956 = vadd.f32 %v953, 1.0
    %v957 = vlog2.pop %v956
    %v958 = vmul.f32 %v957, 0.6931472
    %v959 = vmul.f32 -0.5, %v953
    %v960 = vadd.f32 %v959, 1.0
    %v961 = vmul.f32 %v960, %v953
    %v962 = vand.u32 2147483647, %v953
    %vm963 = vcmp.lt.f32.partialorder %v962, 0.0004427343
    %v964 = vsel %vm963, %v961, %v958
    %v965 = vadd.f32 %v955, 1.0
    %v966 = vlog2.pop %v965
    %v967 = vmul.f32 %v966, 0.6931472
    %v968 = vmul.f32 -0.5, %v955
    %v969 = vadd.f32 %v968, 1.0
    %v970 = vmul.f32 %v969, %v955
    %v971 = vand.u32 2147483647, %v955
    %vm972 = vcmp.lt.f32.partialorder %v971, 0.0004427343
    %v973 = vsel %vm972, %v970, %v967
    %v974 = vadd.f32 %v946, %v964
    %v975 = vadd.f32 %v947, %v973
    %v976 = vmin.f32 %v974, 100.0
    %v977 = vmin.f32 %v975, 100.0
    %vm978 = vcmask 7168
    %v979 = vsel %vm978, %v944, 0.0
    %v980 = vsel %vm978, %v945, 0.0
    %v981 = vadd.f32 %v979, %v980
    %982 = vadd.xlane.f32.xlu0 %v981
    %v983 = vpop.xlane.xlu0 %982
    %v984 = vrot.slane %v983, 4
    %v985 = vadd.f32 %v983, %v984
    %v986 = vrot.slane %v985, 2
    %v987 = vadd.f32 %v985, %v986
    %v988 = vrot.slane %v987, 1
    %v989 = vadd.f32 %v987, %v988
    %s990 = vtos %v989
    %v991 = vsel %vm978, %v976, 0.0
    %v992 = vsel %vm978, %v977, 0.0
    %v993 = vadd.f32 %v991, %v992
    %994 = vadd.xlane.f32.xlu0 %v993
    %v995 = vpop.xlane.xlu0 %994
    %v996 = vrot.slane %v995, 4
    %v997 = vadd.f32 %v995, %v996
    %v998 = vrot.slane %v997, 2
    %v999 = vadd.f32 %v997, %v998
    %v1000 = vrot.slane %v999, 1
    %v1001 = vadd.f32 %v999, %v1000
    %s1002 = vtos %v1001
    %s1003 = sadd.f32 %s990, %s1002
    %v1004 = vrcp.pop 32.0
    %s1005 = vtos %v1004
    %s1006 = smul.f32 %s1003, %s1005
    %s1007 = scalar_lea.smem [#allocation11], 0
    %1008 = sst [smem:[%s1007]] %s1006
    // Predicated region
    $region82: #{inspectionl_loss.1} parent=1 // pred_check
      _
    $region83: #{inspectionl_loss.1} parent=1 // pred_check_branch
      %1010 = sbr.rel (0) target = $region85
    $region84: #{inspectionl_loss.1} parent=1 // pred_region
      %s1012 = ssub.s32 16, 16
      %1013 = vsyncadd [#allocation4], %s1012
      %1016 = dma.smem_to_hbm [#allocation11], 16, %s15, [#allocation4]
    $region85: #{inspectionl_loss.1} parent=1 // pred_fallthru
      _
    // Predicated region
    $region86: #{inspectionl_loss.1} parent=1 // pred_check
      _
    $region87: #{inspectionl_loss.1} parent=1 // pred_check_branch
      %1018 = sbr.rel (0) target = $region89
    $region88: #{inspectionl_loss.1} parent=1 // pred_region
      %1019 = dma.done [#allocation4], 16
    $region89: #{inspectionl_loss.1} parent=1 // pred_fallthru
      _
    %1020 = sfence
    %1021 = vsyncpa [#allocation3], 1
    %1022 = vsyncpa [#allocation6], 1
    %1023 = vsyncpa [#allocation9], 1
    %1024 = vsyncpa [#allocation4], 1

</llo_original>
